<compile_context>
chip_gen: v6e
topology: v6e:2x2x1
jax: 0.10.0
libtpu: 0.0.40
codegen_flags: <defaults>
</compile_context>

<pallas_src>
import functools

import jax
import jax.numpy as jnp
from jax.experimental import pallas as pl
from jax.experimental.pallas import tpu as pltpu

_LANE = 128
_MIB = 1024 * 1024


def _round_up(n, m):
    return ((n + m - 1) // m) * m


def _vmem_capacity_bytes():
    """Best-effort per-core VMEM query; default to 128 MiB parts."""
    try:
        info = pltpu.get_tpu_info()
        cap = getattr(info, "vmem_capacity_bytes", None)
        if cap:
            return int(cap)
    except Exception:
        pass
    return 128 * _MIB


def _pick_length_tile(l_out, rows_in, rows_out):
    """Output-length tile (lane dim, multiple of 128), sized per generation.

    Keeps the double-buffered f32 input/output tiles well inside the scoped
    VMEM budget on both 64 MiB (v7x) and 128 MiB (v5e/v6e) parts.
    """
    cap = _vmem_capacity_bytes()
    max_tl = 1024 if cap <= 64 * _MIB else 2048
    budget = 8 * _MIB  # double-buffered f32 in + out tiles
    tl = budget // (8 * max(rows_in + rows_out, 1))
    tl = max(_LANE, min(max_tl, (tl // _LANE) * _LANE))
    tl = min(tl, _round_up(l_out, _LANE))
    return max(tl, _LANE)


def _vmem_limit_bytes(per_step_f32_elems):
    """Scoped-VMEM request: 2x per-step tiles (double buffering) + slack,
    never more than 3/4 of the physical VMEM on this part."""
    cap = _vmem_capacity_bytes()
    hi = max(32 * _MIB, (cap * 3) // 4)
    need = 2 * 4 * per_step_f32_elems + 4 * _MIB
    return int(min(hi, max(32 * _MIB, need)))


def _elu(acc):
    # ELU(alpha=1): x if x > 0 else exp(x) - 1.  exp(min(x, 0)) keeps the EUP
    # argument bounded; exp - 1 (not expm1) is kept for guaranteed lowering.
    return jnp.where(acc > 0, acc, jnp.exp(jnp.minimum(acc, 0.0)) - 1.0)


# ----------------------------- stride == 1 path ------------------------------

def _conv_elu_kernel_s1(x_ref, xh_ref, w_ref, o_ref, *, K, TL):
    """Fused stride-1 conv1d + ELU for one (Cout, TL) output tile.

    x_ref:  (Cin, TL)       input tile
    xh_ref: (Cin, HALO)     right halo (next >= K-1 input columns)
    w_ref:  (K, Cout, Cin)  conv weights (resident across the grid)
    o_ref:  (Cout, TL)      output tile, lane-dense along length
    """
    x = jnp.concatenate([x_ref[...], xh_ref[...]], axis=-1)   # (Cin, TL+HALO)
    acc = jnp.zeros(o_ref.shape, jnp.float32)
    for k in range(K):   # small static K -> static lane shifts + MXU matmuls
        acc = acc + jnp.dot(w_ref[k], x[:, k:k + TL],
                            preferred_element_type=jnp.float32)
    o_ref[...] = _elu(acc).astype(o_ref.dtype)


def _conv1d_elu_stride1(x, w, padding):
    N, Cin, L = x.shape
    Cout, _, K = w.shape
    Lout = L + 2 * padding - K + 1

    TL = _pick_length_tile(Lout, Cin, Cout)
    HALO = _round_up(max(K - 1, 1), _LANE)
    TL = _round_up(max(TL, HALO), HALO)          # TL % HALO == 0 (halo index map)
    num_tiles = pl.cdiv(Lout, TL)
    Lpad_out = num_tiles * TL
    Lpad_in = Lpad_out + HALO

    # Zero-pad once: `padding` zeros on the left, zeros out to Lpad_in on the
    # right (covers the conv padding plus the last tile's halo overrun).
    xp = jnp.pad(x, ((0, 0), (0, 0), (padding, Lpad_in - L - padding)))
    wk = jnp.transpose(w, (2, 0, 1))                      # (K, Cout, Cin)

    kernel = functools.partial(_conv_elu_kernel_s1, K=K, TL=TL)
    per_step = Cin * (TL + HALO) + Cout * TL + K * Cout * Cin
    out = pl.pallas_call(
        kernel,
        out_shape=jax.ShapeDtypeStruct((N, Cout, Lpad_out), x.dtype),
        grid=(N, num_tiles),
        in_specs=[
            # main input tile
            pl.BlockSpec((None, Cin, TL), lambda n, j: (n, 0, j)),
            # right halo: first HALO lanes of the next tile (same HBM array)
            pl.BlockSpec((None, Cin, HALO),
                         lambda n, j: (n, 0, (j + 1) * (TL // HALO))),
            # weights: constant block index -> fetched once, stays resident
            pl.BlockSpec((K, Cout, Cin), lambda n, j: (0, 0, 0)),
        ],
        out_specs=pl.BlockSpec((None, Cout, TL), lambda n, j: (n, 0, j)),
        compiler_params=pltpu.CompilerParams(
            dimension_semantics=("parallel", "parallel"),
            vmem_limit_bytes=_vmem_limit_bytes(per_step),
        ),
        cost_estimate=pl.CostEstimate(
            flops=2 * N * Lpad_out * Cout * Cin * K,
            transcendentals=N * Lpad_out * Cout,
            bytes_accessed=4 * (N * Cin * Lpad_in
                                + N * Cin * HALO * num_tiles
                                + N * Cout * Lpad_out + K * Cout * Cin),
        ),
    )(xp, xp, wk)
    return out[:, :, :Lout]


# ---------------------------- general stride path ----------------------------

def _matmul_elu_kernel(a_ref, w_ref, o_ref):
    """o = ELU(W[Cout, CK] @ A[CK, TL]) with lane-dense TL output."""
    acc = jnp.dot(w_ref[...], a_ref[...], preferred_element_type=jnp.float32)
    o_ref[...] = _elu(acc).astype(o_ref.dtype)


def _conv1d_elu_general(x, w, stride, padding):
    N, Cin, L = x.shape
    Cout, _, K = w.shape
    Lout = (L + 2 * padding - K) // stride + 1
    CK = Cin * K

    TL = _pick_length_tile(Lout, CK, Cout)
    num_tiles = pl.cdiv(Lout, TL)
    Lpad_out = num_tiles * TL

    # Transposed im2col: A[n, k*Cin + ci, l] = x_padded[n, ci, l*stride + k].
    right_pad = padding + (Lpad_out - Lout) * stride + K
    xp = jnp.pad(x, ((0, 0), (0, 0), (padding, right_pad)))
    starts = jnp.arange(Lpad_out) * stride
    cols = jnp.stack([jnp.take(xp, starts + k, axis=2) for k in range(K)],
                     axis=1)                              # (N, K, Cin, Lpad_out)
    a = cols.reshape(N, CK, Lpad_out)
    w2 = jnp.transpose(w, (0, 2, 1)).reshape(Cout, CK)    # matches k*Cin + ci

    per_step = CK * TL + Cout * TL + Cout * CK
    out = pl.pallas_call(
        _matmul_elu_kernel,
        out_shape=jax.ShapeDtypeStruct((N, Cout, Lpad_out), x.dtype),
        grid=(N, num_tiles),
        in_specs=[
            pl.BlockSpec((None, CK, TL), lambda n, j: (n, 0, j)),
            pl.BlockSpec((Cout, CK), lambda n, j: (0, 0)),
        ],
        out_specs=pl.BlockSpec((None, Cout, TL), lambda n, j: (n, 0, j)),
        compiler_params=pltpu.CompilerParams(
            dimension_semantics=("parallel", "parallel"),
            vmem_limit_bytes=_vmem_limit_bytes(per_step),
        ),
        cost_estimate=pl.CostEstimate(
            flops=2 * N * Lpad_out * Cout * CK,
            transcendentals=N * Lpad_out * Cout,
            bytes_accessed=4 * (N * CK * Lpad_out + N * Cout * Lpad_out
                                + Cout * CK),
        ),
    )(a, w2)
    return out[:, :, :Lout]


# --------------------------------- wrapper -----------------------------------

@functools.partial(jax.jit, static_argnames=("stride", "padding"))
def basic_conv1d(x, w, *, stride, padding):
    """Equivalent of BasicConv1d.forward: Conv1d(bias=False) + ELU.

    x: (N, C_in, L) float32, w: (C_out, C_in, K) float32 (nn.Conv1d weight).
    Returns (N, C_out, L_out) float32 in NCL layout.
    """
    N, Cin, L = x.shape
    Cout, Cin_w, K = w.shape
    assert Cin == Cin_w
    Lout = (L + 2 * padding - K) // stride + 1
    assert Lout > 0, "empty output"
    if stride == 1:
        return _conv1d_elu_stride1(x, w, padding)
    # TODO(synk): stride > 1 still materializes a transposed im2col in HBM; a
    # strided in-kernel gather would remove that extra pass.
    return _conv1d_elu_general(x, w, stride, padding)


def _reference(x, w, stride, padding):
    """Pure-JAX reference (lax conv + ELU) for a sanity check."""
    out = jax.lax.conv_general_dilated(
        x, w,
        window_strides=(stride,),
        padding=[(padding, padding)],
        dimension_numbers=("NCH", "OIH", "NCH"),
    )
    return jnp.where(out > 0, out, jnp.exp(jnp.minimum(out, 0.0)) - 1.0)


if __name__ == "__main__":
    # BasicConv1d(in_planes=4, out_planes=8, kernel_size=3, stride=1, padding=1)
    in_planes, out_planes = 4, 8
    kernel_size, stride, padding = 3, 1, 1

    key = jax.random.PRNGKey(0)
    kx, kw = jax.random.split(key)
    N, L = 2, 16
    x = jax.random.normal(kx, (N, in_planes, L), dtype=jnp.float32)
    w = jax.random.normal(kw, (out_planes, in_planes, kernel_size),
                          dtype=jnp.float32) * 0.1

    # Main (stride == 1, halo) path.
    out = jax.block_until_ready(basic_conv1d(x, w, stride=stride, padding=padding))
    ref = _reference(x, w, stride, padding)
    assert out.shape == ref.shape == (N, out_planes, L)
    assert jnp.allclose(out, ref, atol=1e-4, rtol=1e-4), "stride-1 mismatch"

    # General (stride != 1) fallback path.
    out2 = jax.block_until_ready(basic_conv1d(x, w, stride=2, padding=1))
    ref2 = _reference(x, w, 2, 1)
    assert out2.shape == ref2.shape
    assert jnp.allclose(out2, ref2, atol=1e-4, rtol=1e-4), "stride-2 mismatch"

    print("KERNEL_OK")
</pallas_src>

<mosaic_0001>
module attributes {stable_mosaic.version = 11 : i64} {
  func.func @_conv_elu_kernel_s1(%arg0: i32, %arg1: i32, %arg2: memref<1x4x128xf32, #tpu.memory_space<vmem>>, %arg3: memref<1x4x128xf32, #tpu.memory_space<vmem>>, %arg4: memref<3x8x4xf32, #tpu.memory_space<vmem>>, %arg5: memref<1x8x128xf32, #tpu.memory_space<vmem>>) attributes {dimension_semantics = [#tpu.dimension_semantics<parallel>, #tpu.dimension_semantics<parallel>], iteration_bounds = array<i64: 2, 1>, scalar_prefetch = 0 : i64, scratch_operands = 0 : i64, tpu.core_type = #tpu.core_type<tc>, window_params = [{transform_indices = @transform_0, window_bounds = array<i64: 1, 4, 128>}, {transform_indices = @transform_1, window_bounds = array<i64: 1, 4, 128>}, {pipeline_mode = #tpu.pipeline_mode<synchronous>, transform_indices = @transform_2, window_bounds = array<i64: 3, 8, 4>}, {transform_indices = @transform_3, window_bounds = array<i64: 1, 8, 128>}]} {
    %c0 = arith.constant 0 : index
    %c0_0 = arith.constant 0 : index
    %c0_1 = arith.constant 0 : index
    %0 = vector.load %arg2[%c0, %c0_0, %c0_1] : memref<1x4x128xf32, #tpu.memory_space<vmem>>, vector<1x4x128xf32>
    %1 = vector.shape_cast %0 : vector<1x4x128xf32> to vector<4x128xf32>
    %c0_2 = arith.constant 0 : index
    %c0_3 = arith.constant 0 : index
    %c0_4 = arith.constant 0 : index
    %2 = vector.load %arg3[%c0_2, %c0_3, %c0_4] : memref<1x4x128xf32, #tpu.memory_space<vmem>>, vector<1x4x128xf32>
    %3 = vector.shape_cast %2 : vector<1x4x128xf32> to vector<4x128xf32>
    %4 = tpu.concatenate %1, %3 in 1 : vector<4x128xf32>, vector<4x128xf32> -> vector<4x256xf32>
    %cst = arith.constant 0.000000e+00 : f32
    %5 = vector.broadcast %cst : f32 to vector<8x128xf32>
    %c0_5 = arith.constant 0 : index
    %c0_6 = arith.constant 0 : index
    %c0_7 = arith.constant 0 : index
    %6 = vector.load %arg4[%c0_5, %c0_6, %c0_7] : memref<3x8x4xf32, #tpu.memory_space<vmem>>, vector<1x8x4xf32>
    %7 = vector.shape_cast %6 : vector<1x8x4xf32> to vector<8x4xf32>
    %8 = vector.extract_strided_slice %4 {offsets = [0, 0], sizes = [4, 128], strides = [1, 1]} : vector<4x256xf32> to vector<4x128xf32>
    %cst_8 = arith.constant dense<0.000000e+00> : vector<8x128xf32>
    %9 = tpu.matmul %7, %8, %cst_8 {dimension_numbers = #tpu.dot_dimension_numbers<[1], [0], [0], [1], [0, 0, 1, 1], [], []>} : vector<8x4xf32>, vector<4x128xf32>, vector<8x128xf32> -> vector<8x128xf32>
    %10 = arith.addf %5, %9 : vector<8x128xf32>
    %c1 = arith.constant 1 : index
    %c0_9 = arith.constant 0 : index
    %c0_10 = arith.constant 0 : index
    %11 = vector.load %arg4[%c1, %c0_9, %c0_10] : memref<3x8x4xf32, #tpu.memory_space<vmem>>, vector<1x8x4xf32>
    %12 = vector.shape_cast %11 : vector<1x8x4xf32> to vector<8x4xf32>
    %13 = vector.extract_strided_slice %4 {offsets = [0, 1], sizes = [4, 128], strides = [1, 1]} : vector<4x256xf32> to vector<4x128xf32>
    %cst_11 = arith.constant dense<0.000000e+00> : vector<8x128xf32>
    %14 = tpu.matmul %12, %13, %cst_11 {dimension_numbers = #tpu.dot_dimension_numbers<[1], [0], [0], [1], [0, 0, 1, 1], [], []>} : vector<8x4xf32>, vector<4x128xf32>, vector<8x128xf32> -> vector<8x128xf32>
    %15 = arith.addf %10, %14 : vector<8x128xf32>
    %c2 = arith.constant 2 : index
    %c0_12 = arith.constant 0 : index
    %c0_13 = arith.constant 0 : index
    %16 = vector.load %arg4[%c2, %c0_12, %c0_13] : memref<3x8x4xf32, #tpu.memory_space<vmem>>, vector<1x8x4xf32>
    %17 = vector.shape_cast %16 : vector<1x8x4xf32> to vector<8x4xf32>
    %18 = vector.extract_strided_slice %4 {offsets = [0, 2], sizes = [4, 128], strides = [1, 1]} : vector<4x256xf32> to vector<4x128xf32>
    %cst_14 = arith.constant dense<0.000000e+00> : vector<8x128xf32>
    %19 = tpu.matmul %17, %18, %cst_14 {dimension_numbers = #tpu.dot_dimension_numbers<[1], [0], [0], [1], [0, 0, 1, 1], [], []>} : vector<8x4xf32>, vector<4x128xf32>, vector<8x128xf32> -> vector<8x128xf32>
    %20 = arith.addf %15, %19 : vector<8x128xf32>
    %cst_15 = arith.constant 0.000000e+00 : f32
    %21 = vector.broadcast %cst_15 : f32 to vector<8x128xf32>
    %22 = arith.cmpf ogt, %20, %21 : vector<8x128xf32>
    %cst_16 = arith.constant 0.000000e+00 : f32
    %23 = vector.broadcast %cst_16 : f32 to vector<8x128xf32>
    %24 = arith.minimumf %20, %23 : vector<8x128xf32>
    %25 = math.exp %24 : vector<8x128xf32>
    %cst_17 = arith.constant 1.000000e+00 : f32
    %26 = vector.broadcast %cst_17 : f32 to vector<8x128xf32>
    %27 = arith.subf %25, %26 : vector<8x128xf32>
    %28 = arith.select %22, %20, %27 : vector<8x128xi1>, vector<8x128xf32>
    %c0_18 = arith.constant 0 : index
    %c0_19 = arith.constant 0 : index
    %c0_20 = arith.constant 0 : index
    %29 = vector.load %arg5[%c0_18, %c0_19, %c0_20] : memref<1x8x128xf32, #tpu.memory_space<vmem>>, vector<1x8x128xf32>
    %30 = vector.shape_cast %29 : vector<1x8x128xf32> to vector<8x128xf32>
    %31 = vector.shape_cast %28 : vector<8x128xf32> to vector<1x8x128xf32>
    tpu.vector_store %arg5[%c0_18, %c0_19, %c0_20], %31 {strides = array<i32>} : memref<1x8x128xf32, #tpu.memory_space<vmem>>, vector<1x8x128xf32>,
    return
  }
  func.func @transform_0(%arg0: i32, %arg1: i32) -> (i32, i32, i32) {
    %c0_i32 = arith.constant 0 : i32
    %c0_i32_0 = arith.constant 0 : i32
    return %arg0, %c0_i32, %arg1 : i32, i32, i32
  }
  func.func @transform_1(%arg0: i32, %arg1: i32) -> (i32, i32, i32) {
    %c1_i32 = arith.constant 1 : i32
    %0 = arith.addi %arg1, %c1_i32 : i32
    %c1_i32_0 = arith.constant 1 : i32
    %1 = arith.muli %0, %c1_i32_0 : i32
    %c0_i32 = arith.constant 0 : i32
    %c0_i32_1 = arith.constant 0 : i32
    return %arg0, %c0_i32, %1 : i32, i32, i32
  }
  func.func @transform_2(%arg0: i32, %arg1: i32) -> (i32, i32, i32) {
    %c0_i32 = arith.constant 0 : i32
    %c0_i32_0 = arith.constant 0 : i32
    %c0_i32_1 = arith.constant 0 : i32
    %c0_i32_2 = arith.constant 0 : i32
    return %c0_i32, %c0_i32_0, %c0_i32_1 : i32, i32, i32
  }
  func.func @transform_3(%arg0: i32, %arg1: i32) -> (i32, i32, i32) {
    %c0_i32 = arith.constant 0 : i32
    %c0_i32_0 = arith.constant 0 : i32
    return %arg0, %c0_i32, %arg1 : i32, i32, i32
  }
}

</mosaic_0001>

<llo_original>
// kernel: basic_conv1d.1
$region0: #{basic_conv1d.1}
  #allocation0 [shape = 'u32[]', space=smem, size = 0x4, offset = 0x4, fixed_abs, tag = 'smem constant byte address 0x4 - core index']
  #allocation1 [shape = 'u32[144,128]{1,0:T(1,128)}', space=vmem, size = 0x12000, scoped, tag = 'internal scratch']
  %s0 = inlined_call_operand.vmem [shape: f32[2,4,256], index: 0, kind: input, shape index: {}, may-alias: {0,1}]
  %s1 = inlined_call_operand.vmem [shape: f32[2,4,256], index: 1, kind: input, shape index: {}, may-alias: {0,1}]
  %s2 = inlined_call_operand.vmem [shape: f32[3,8,4], index: 2, kind: input, shape index: {}]
  %s3 = inlined_call_operand.hbm [shape: f32[2,8,128], index: 3, kind: output, shape index: {}]
  %s4 = sld [smem:[#allocation0]]
  $region45: #{basic_conv1d.1} parent=0
    _
  %s6 = ssub.s32 1, %s4
  %s7 = scalar_select 0, %s6, %s4
  $region1: #{basic_conv1d.1} parent=0
    #allocation2 [shape = 'u8[8192]{0}', space=vmem, size = 0x2000, scoped, tag = 'output window, operand 0']
    #allocation3 [shape = 's32[2]{0}', space=sflag, size = 0x8, scoped, tag = 'scoped memory for basic_conv1d.1']
    %8 = vsyncpa [#allocation3], 0
    %s9 = scalar_lea.sflag [#allocation3], 1
    %10 = vsyncpa %s9, 0
    loop: start=0, step=1, limit=4
    $region2: #{basic_conv1d.1} parent=1 // loop_pre_header
      _
    $region3: #{basic_conv1d.1} parent=1 // loop_header
      %s12 = sphi 0, %s16
      %p13 = scmp.ge.s32.totalorder %s12, 4
      %s19 = sphi 0, %s31
      %s20 = sphi 0, %s27
      %s21 = sphi 0, %s19
      %s22 = sphi 0, %s20
      %s23 = sphi 0, %s21
      %s24 = sphi 0, %s22
      %s36 = sphi 0, %s38
      %s39 = sphi 0, %s36
      %s40 = sphi 0, %s39
      %s56 = sphi 0, %s40
      %s66 = sphi 0, %s68
      %s69 = sphi 0, %s66
      %s70 = sphi 0, %s69
      %s86 = sphi 0, %s70
      %s90 = sphi 0, %s90
      %s92 = sphi 0, %s90
      %s93 = sphi 0, %s92
      %s107 = sphi 0, %s93
      %s115 = sphi 0, %s117
      %s118 = sphi 0, %s115
      %s119 = sphi 0, %s118
      %s135 = sphi 0, %s119
    $region4: #{basic_conv1d.1} parent=1 // loop_header_branch
      %15 = sbr.rel (%p13) target = $region8
    $region5: #{basic_conv1d.1} parent=1 // loop_body
      %s17 = ssub.s32 %s12, 1
      %s18 = ssub.s32 %s12, 2
      %s25 = sadd.s32 1, %s20
      %p26 = scmp.ge.s32.totalorder %s25, 1
      %s27 = scalar_select %p26, 0, %s25
      %s28 = sadd.s32 1, %s19
      %s29 = scalar_select %p26, %s28, %s19
      %p30 = scmp.ge.s32.totalorder %s29, 2
      %s31 = scalar_select %p30, 0, %s29
      %s32 = ssub.s32 %s19, %s31
      %s33 = ssub.s32 %s20, %s27
      %s34 = sor.u32 %s32, %s33
      %p35 = scmp.eq.s32.totalorder %s34, 0
      %s37 = sadd.s32 %s36, 1
      %s38 = scalar_select %p35, %s36, %s37
      %p41 = pneg %p35
      %p42 = scmp.eq.s32.totalorder %s12, 1
      %p43 = por %p41, %p42
      %p44 = scmp.ne.s32.totalorder %s36, %s39
      %p45 = scmp.eq.s32.totalorder %s12, 0
      %p46 = por %p44, %p45
      %p47 = scmp.ne.s32.totalorder %s36, %s39
      %p48 = scmp.eq.s32.totalorder %s17, 1
      %p49 = por %p47, %p48
      %p50 = scmp.ne.s32.totalorder %s39, %s40
      %p51 = scmp.eq.s32.totalorder %s17, 0
      %p52 = por %p50, %p51
      %p53 = scmp.ne.s32.totalorder %s39, %s40
      %p54 = scmp.eq.s32.totalorder %s18, 1
      %p55 = por %p53, %p54
      %p57 = scmp.ne.s32.totalorder %s40, %s56
      %p58 = scmp.eq.s32.totalorder %s18, 0
      %p59 = por %p57, %p58
      %s60 = sadd.s32 %s20, 1
      %s61 = sadd.s32 %s27, 1
      %s62 = ssub.s32 %s19, %s31
      %s63 = ssub.s32 %s60, %s61
      %s64 = sor.u32 %s62, %s63
      %p65 = scmp.eq.s32.totalorder %s64, 0
      %s67 = sadd.s32 %s66, 1
      %s68 = scalar_select %p65, %s66, %s67
      %p71 = pneg %p65
      %p72 = scmp.eq.s32.totalorder %s12, 1
      %p73 = por %p71, %p72
      %p74 = scmp.ne.s32.totalorder %s66, %s69
      %p75 = scmp.eq.s32.totalorder %s12, 0
      %p76 = por %p74, %p75
      %p77 = scmp.ne.s32.totalorder %s66, %s69
      %p78 = scmp.eq.s32.totalorder %s17, 1
      %p79 = por %p77, %p78
      %p80 = scmp.ne.s32.totalorder %s69, %s70
      %p81 = scmp.eq.s32.totalorder %s17, 0
      %p82 = por %p80, %p81
      %p83 = scmp.ne.s32.totalorder %s69, %s70
      %p84 = scmp.eq.s32.totalorder %s18, 1
      %p85 = por %p83, %p84
      %p87 = scmp.ne.s32.totalorder %s70, %s86
      %p88 = scmp.eq.s32.totalorder %s18, 0
      %p89 = por %p87, %p88
      %s91 = sadd.s32 %s90, 1
      %p94 = scmp.eq.s32.totalorder %s12, 1
      %p95 = scmp.ne.s32.totalorder %s90, %s92
      %p96 = scmp.eq.s32.totalorder %s12, 0
      %p97 = por %p95, %p96
      %p98 = scmp.ne.s32.totalorder %s90, %s92
      %p99 = scmp.eq.s32.totalorder %s17, 1
      %p100 = por %p98, %p99
      %p101 = scmp.ne.s32.totalorder %s92, %s93
      %p102 = scmp.eq.s32.totalorder %s17, 0
      %p103 = por %p101, %p102
      %p104 = scmp.ne.s32.totalorder %s92, %s93
      %p105 = scmp.eq.s32.totalorder %s18, 1
      %p106 = por %p104, %p105
      %p108 = scmp.ne.s32.totalorder %s93, %s107
      %p109 = scmp.eq.s32.totalorder %s18, 0
      %p110 = por %p108, %p109
      %s111 = ssub.s32 %s19, %s31
      %s112 = ssub.s32 %s20, %s27
      %s113 = sor.u32 %s111, %s112
      %p114 = scmp.eq.s32.totalorder %s113, 0
      %s116 = sadd.s32 %s115, 1
      %s117 = scalar_select %p114, %s115, %s116
      %p120 = pneg %p114
      %p121 = scmp.eq.s32.totalorder %s12, 1
      %p122 = por %p120, %p121
      %p123 = scmp.ne.s32.totalorder %s115, %s118
      %p124 = scmp.eq.s32.totalorder %s12, 0
      %p125 = por %p123, %p124
      %p126 = scmp.ne.s32.totalorder %s115, %s118
      %p127 = scmp.eq.s32.totalorder %s17, 1
      %p128 = por %p126, %p127
      %p129 = scmp.ne.s32.totalorder %s118, %s119
      %p130 = scmp.eq.s32.totalorder %s17, 0
      %p131 = por %p129, %p130
      %p132 = scmp.ne.s32.totalorder %s118, %s119
      %p133 = scmp.eq.s32.totalorder %s18, 1
      %p134 = por %p132, %p133
      %p136 = scmp.ne.s32.totalorder %s119, %s135
      %p137 = scmp.eq.s32.totalorder %s18, 0
      %p138 = por %p136, %p137
      %p139 = scmp.le.s32.totalorder 1, %s12
      %p140 = scmp.lt.s32.totalorder %s12, 3
      %p141 = pnand %p139, %p140
      %p142 = pneg %p141
      // Predicated region
      $region9: #{basic_conv1d.1} parent=5 // pred_check
        _
      $region10: #{basic_conv1d.1} parent=5 // pred_check_branch
        %144 = sbr.rel (%p141) target = $region12
      $region11: #{basic_conv1d.1} parent=5 // pred_region
        %s145 = ssub.s32 %s12, 1
        // Predicated region
        $region13: #{basic_conv1d.1} parent=11 // pred_check
          %p146 = pneg %p103
        $region14: #{basic_conv1d.1} parent=11 // pred_check_branch
          %148 = sbr.rel (%p146) target = $region16
        $region15: #{basic_conv1d.1} parent=11 // pred_region
          _
        $region16: #{basic_conv1d.1} parent=11 // pred_fallthru
          _
      $region12: #{basic_conv1d.1} parent=5 // pred_fallthru
        _
      %p149 = scmp.lt.s32.totalorder %s12, 2
      // Predicated region
      $region17: #{basic_conv1d.1} parent=5 // pred_check
        %p150 = pneg %p149
      $region18: #{basic_conv1d.1} parent=5 // pred_check_branch
        %152 = sbr.rel (%p150) target = $region20
      $region19: #{basic_conv1d.1} parent=5 // pred_region
        // Predicated region
        $region21: #{basic_conv1d.1} parent=19 // pred_check
          %p153 = pneg %p46
        $region22: #{basic_conv1d.1} parent=19 // pred_check_branch
          %155 = sbr.rel (%p153) target = $region24
        $region23: #{basic_conv1d.1} parent=19 // pred_region
          %p156 = scmp.lt.s32.totalorder %s19, 1
          %s157 = scalar_select %p156, %s19, 1
          %p158 = scmp.lt.s32.totalorder %s20, 1
          %s159 = scalar_select %p158, %s20, 1
          %s160 = smul.addr %s157, 2
          %s161 = sadd.s32 %s159, %s160
          %s162 = smul.addr %s161, 4
          %s163 = scalar_lea.vmem %s0, %s162
        $region24: #{basic_conv1d.1} parent=19 // pred_fallthru
          _
        // Predicated region
        $region25: #{basic_conv1d.1} parent=19 // pred_check
          %p164 = pneg %p76
        $region26: #{basic_conv1d.1} parent=19 // pred_check_branch
          %166 = sbr.rel (%p164) target = $region28
        $region27: #{basic_conv1d.1} parent=19 // pred_region
          %s167 = sadd.s32 %s20, 1
          %p168 = scmp.lt.s32.totalorder %s19, 1
          %s169 = scalar_select %p168, %s19, 1
          %p170 = scmp.lt.s32.totalorder %s167, 1
          %s171 = scalar_select %p170, %s167, 1
          %s172 = smul.addr %s169, 2
          %s173 = sadd.s32 %s171, %s172
          %s174 = smul.addr %s173, 4
          %s175 = scalar_lea.vmem %s1, %s174
          %s176 = sadd.s32 %s20, 1
        $region28: #{basic_conv1d.1} parent=19 // pred_fallthru
          _
      $region20: #{basic_conv1d.1} parent=5 // pred_fallthru
        _
      %p177 = scmp.le.s32.totalorder 1, %s12
      %p178 = scmp.lt.s32.totalorder %s12, 3
      %p179 = pnand %p177, %p178
      %p180 = pneg %p179
      // Predicated region
      $region29: #{basic_conv1d.1} parent=5 // pred_check
        _
      $region30: #{basic_conv1d.1} parent=5 // pred_check_branch
        %182 = sbr.rel (%p179) target = $region32
      $region31: #{basic_conv1d.1} parent=5 // pred_region
        %s183 = ssub.s32 %s12, 1
        %p184 = scmp.lt.s32.totalorder %s21, 1
        %s185 = scalar_select %p184, %s21, 1
        %p186 = scmp.lt.s32.totalorder %s22, 1
        %s187 = scalar_select %p186, %s22, 1
        %s188 = smul.addr %s185, 2
        %s189 = sadd.s32 %s187, %s188
        %s190 = smul.addr %s189, 4
        %s191 = scalar_lea.vmem %s0, %s190
        %p192 = pneg %p52
        %p193 = pneg %p49
        %s194 = sadd.s32 %s22, 1
        %p195 = scmp.lt.s32.totalorder %s21, 1
        %s196 = scalar_select %p195, %s21, 1
        %p197 = scmp.lt.s32.totalorder %s194, 1
        %s198 = scalar_select %p197, %s194, 1
        %s199 = smul.addr %s196, 2
        %s200 = sadd.s32 %s198, %s199
        %s201 = smul.addr %s200, 4
        %s202 = scalar_lea.vmem %s1, %s201
        %p203 = pneg %p82
        %p204 = pneg %p79
        %p205 = pneg %p103
        %p206 = pneg %p100
        %p207 = pneg %p131
        %p208 = pneg %p128
        %s209 = sand.u32 %s118, 1
        %s210 = scalar_lea.sflag [#allocation3], %s209
        %s211 = sand.u32 %s118, 1
        %s212 = smul.addr %s211, 8
        %s213 = scalar_lea.vmem [#allocation2], %s212
        %p214 = scmp.lt.s32.totalorder %s21, 1
        %s215 = scalar_select %p214, %s21, 1
        %p216 = scmp.lt.s32.totalorder %s22, 1
        %s217 = scalar_select %p216, %s22, 1
        %s218 = smul.addr %s215, 2
        %s219 = sadd.s32 %s217, %s218
        %s220 = smul.addr %s219, 4
        %s221 = scalar_lea.vmem %s0, %s220
        %s222 = sadd.s32 %s22, 1
        %p223 = scmp.lt.s32.totalorder %s21, 1
        %s224 = scalar_select %p223, %s21, 1
        %p225 = scmp.lt.s32.totalorder %s222, 1
        %s226 = scalar_select %p225, %s222, 1
        %s227 = smul.addr %s224, 2
        %s228 = sadd.s32 %s226, %s227
        %s229 = smul.addr %s228, 4
        %s230 = scalar_lea.vmem %s1, %s229
        %s231 = sadd.s32 %s22, 1
        %v232 = vld [vmem:[%s221] sm:$0xf]
        %v233 = vld [vmem:[%s230] sm:$0xf]
        %v234 = vld [vmem:[%s2] sm:$0xff]
        %s235 = scalar_lea.vmem %s2, 8
        %v236 = vld [vmem:[%s235] sm:$0xff]
        %239 = vrot.lane.b32.xlu0 %v232, 127
        %v240 = vpop.permute.xlu0 %239
        %241 = vrot.lane.b32.xlu0 %v233, 127
        %v242 = vpop.permute.xlu0 %241
        %vm243 = vcmask 1039360
        %v244 = vsel %vm243, %v240, %v242
        %vm245 = vcmask 31744
        %v247 = vsel %vm245, %v236, 0
        %vm249 = vcmask 1043456
        %v250 = vsel %vm249, %v244, 0
        %252 = vmatprep.subr.mxu0 0.0
        %253 = vmatpush1.msra.mxu0 0.0
        %254 = vmatprep.subr.mxu0 0.0
        %255 = vmatpush1.msra.mxu0 0.0
        %256 = vmatprep.subr.mxu0 0.0
        %257 = vmatpush1.msra.mxu0 0.0
        %258 = vmatprep.subr.mxu0 0.0
        %259 = vmatpush1.msra.mxu0 0.0
        %260 = vmatprep.subr.mxu0 0.0
        %261 = vmatpush1.msra.mxu0 0.0
        %262 = vmatprep.subr.mxu0 0.0
        %263 = vmatpush1.msra.mxu0 0.0
        %264 = vmatprep.subr.mxu0 0.0
        %265 = vmatpush1.msra.mxu0 0.0
        %266 = vmatprep.subr.mxu0 0.0
        %267 = vmatpush1.msra.mxu0 0.0
        %268 = vmatprep.subr.mxu0 0.0
        %269 = vmatpush1.msra.mxu0 0.0
        %270 = vmatprep.subr.mxu0 0.0
        %271 = vmatpush1.msra.mxu0 0.0
        %272 = vmatprep.subr.mxu0 0.0
        %273 = vmatpush1.msra.mxu0 0.0
        %274 = vmatprep.subr.mxu0 0.0
        %275 = vmatpush1.msra.mxu0 0.0
        %276 = vmatprep.subr.mxu0 0.0
        %277 = vmatpush1.msra.mxu0 0.0
        %278 = vmatprep.subr.mxu0 0.0
        %279 = vmatpush1.msra.mxu0 0.0
        %280 = vmatprep.subr.mxu0 0.0
        %281 = vmatpush1.msra.mxu0 0.0
        %282 = vmatprep.subr.mxu0 0.0
        %283 = vmatpush1.msra.mxu0 %v250
        %284 = vmatprep.subr.mxu0 0.0
        %285 = vmatpush2.msra.mxu0 0.0
        %286 = vmatprep.subr.mxu0 0.0
        %287 = vmatpush2.msra.mxu0 0.0
        %288 = vmatprep.subr.mxu0 0.0
        %289 = vmatpush2.msra.mxu0 0.0
        %290 = vmatprep.subr.mxu0 0.0
        %291 = vmatpush2.msra.mxu0 0.0
        %292 = vmatprep.subr.mxu0 0.0
        %293 = vmatpush2.msra.mxu0 0.0
        %294 = vmatprep.subr.mxu0 0.0
        %295 = vmatpush2.msra.mxu0 0.0
        %296 = vmatprep.subr.mxu0 0.0
        %297 = vmatpush2.msra.mxu0 0.0
        %298 = vmatprep.subr.mxu0 0.0
        %299 = vmatpush2.msra.mxu0 0.0
        %300 = vmatprep.subr.mxu0 0.0
        %301 = vmatpush2.msra.mxu0 0.0
        %302 = vmatprep.subr.mxu0 0.0
        %303 = vmatpush2.msra.mxu0 0.0
        %304 = vmatprep.subr.mxu0 0.0
        %305 = vmatpush2.msra.mxu0 0.0
        %306 = vmatprep.subr.mxu0 0.0
        %307 = vmatpush2.msra.mxu0 0.0
        %308 = vmatprep.subr.mxu0 0.0
        %309 = vmatpush2.msra.mxu0 0.0
        %310 = vmatprep.subr.mxu0 0.0
        %311 = vmatpush2.msra.mxu0 0.0
        %312 = vmatprep.subr.mxu0 0.0
        %313 = vmatpush2.msra.mxu0 0.0
        %314 = vmatprep.subr.mxu0 0.0
        %315 = vmatpush2.msra.mxu0 0.0
        %316 = vmatprep.mubr.f32.mxu0 0.0
        %317 = vmatmul.mubr.f32.gmra.mxu0 %v247
        %v318 = vpop.f32.mrf.mxu0
        %v319 = vadd.f32 0.0, %v318
        %v320 = vpop.f32.mrf.mxu0
        %321 = vdwg.mxu0
        %v323 = vsel %vm245, %v234, 0
        %v325 = vsel %vm249, %v232, 0
        %327 = vmatprep.subr.mxu0 0.0
        %328 = vmatpush1.msra.mxu0 0.0
        %329 = vmatprep.subr.mxu0 0.0
        %330 = vmatpush1.msra.mxu0 0.0
        %331 = vmatprep.subr.mxu0 0.0
        %332 = vmatpush1.msra.mxu0 0.0
        %333 = vmatprep.subr.mxu0 0.0
        %334 = vmatpush1.msra.mxu0 0.0
        %335 = vmatprep.subr.mxu0 0.0
        %336 = vmatpush1.msra.mxu0 0.0
        %337 = vmatprep.subr.mxu0 0.0
        %338 = vmatpush1.msra.mxu0 0.0
        %339 = vmatprep.subr.mxu0 0.0
        %340 = vmatpush1.msra.mxu0 0.0
        %341 = vmatprep.subr.mxu0 0.0
        %342 = vmatpush1.msra.mxu0 0.0
        %343 = vmatprep.subr.mxu0 0.0
        %344 = vmatpush1.msra.mxu0 0.0
        %345 = vmatprep.subr.mxu0 0.0
        %346 = vmatpush1.msra.mxu0 0.0
        %347 = vmatprep.subr.mxu0 0.0
        %348 = vmatpush1.msra.mxu0 0.0
        %349 = vmatprep.subr.mxu0 0.0
        %350 = vmatpush1.msra.mxu0 0.0
        %351 = vmatprep.subr.mxu0 0.0
        %352 = vmatpush1.msra.mxu0 0.0
        %353 = vmatprep.subr.mxu0 0.0
        %354 = vmatpush1.msra.mxu0 0.0
        %355 = vmatprep.subr.mxu0 0.0
        %356 = vmatpush1.msra.mxu0 0.0
        %357 = vmatprep.subr.mxu0 0.0
        %358 = vmatpush1.msra.mxu0 %v325
        %359 = vmatprep.subr.mxu0 0.0
        %360 = vmatpush2.msra.mxu0 0.0
        %361 = vmatprep.subr.mxu0 0.0
        %362 = vmatpush2.msra.mxu0 0.0
        %363 = vmatprep.subr.mxu0 0.0
        %364 = vmatpush2.msra.mxu0 0.0
        %365 = vmatprep.subr.mxu0 0.0
        %366 = vmatpush2.msra.mxu0 0.0
        %367 = vmatprep.subr.mxu0 0.0
        %368 = vmatpush2.msra.mxu0 0.0
        %369 = vmatprep.subr.mxu0 0.0
        %370 = vmatpush2.msra.mxu0 0.0
        %371 = vmatprep.subr.mxu0 0.0
        %372 = vmatpush2.msra.mxu0 0.0
        %373 = vmatprep.subr.mxu0 0.0
        %374 = vmatpush2.msra.mxu0 0.0
        %375 = vmatprep.subr.mxu0 0.0
        %376 = vmatpush2.msra.mxu0 0.0
        %377 = vmatprep.subr.mxu0 0.0
        %378 = vmatpush2.msra.mxu0 0.0
        %379 = vmatprep.subr.mxu0 0.0
        %380 = vmatpush2.msra.mxu0 0.0
        %381 = vmatprep.subr.mxu0 0.0
        %382 = vmatpush2.msra.mxu0 0.0
        %383 = vmatprep.subr.mxu0 0.0
        %384 = vmatpush2.msra.mxu0 0.0
        %385 = vmatprep.subr.mxu0 0.0
        %386 = vmatpush2.msra.mxu0 0.0
        %387 = vmatprep.subr.mxu0 0.0
        %388 = vmatpush2.msra.mxu0 0.0
        %389 = vmatprep.subr.mxu0 0.0
        %390 = vmatpush2.msra.mxu0 0.0
        %391 = vmatprep.mubr.f32.mxu0 0.0
        %392 = vmatmul.mubr.f32.gmra.mxu0 %v323
        %v393 = vpop.f32.mrf.mxu0
        %v394 = vadd.f32 %v319, %v393
        %v395 = vpop.f32.mrf.mxu0
        %396 = vdwg.mxu0
        %s397 = scalar_lea.vmem %s2, 16
        %v398 = vld [vmem:[%s397] sm:$0xff]
        %399 = vrot.lane.b32.xlu0 %v232, 126
        %v400 = vpop.permute.xlu0 %399
        %401 = vrot.lane.b32.xlu0 %v233, 126
        %v402 = vpop.permute.xlu0 %401
        %vm403 = vcmask 1031168
        %v404 = vsel %vm403, %v400, %v402
        %v406 = vsel %vm245, %v398, 0
        %v408 = vsel %vm249, %v404, 0
        %410 = vmatprep.subr.mxu0 0.0
        %411 = vmatpush1.msra.mxu0 0.0
        %412 = vmatprep.subr.mxu0 0.0
        %413 = vmatpush1.msra.mxu0 0.0
        %414 = vmatprep.subr.mxu0 0.0
        %415 = vmatpush1.msra.mxu0 0.0
        %416 = vmatprep.subr.mxu0 0.0
        %417 = vmatpush1.msra.mxu0 0.0
        %418 = vmatprep.subr.mxu0 0.0
        %419 = vmatpush1.msra.mxu0 0.0
        %420 = vmatprep.subr.mxu0 0.0
        %421 = vmatpush1.msra.mxu0 0.0
        %422 = vmatprep.subr.mxu0 0.0
        %423 = vmatpush1.msra.mxu0 0.0
        %424 = vmatprep.subr.mxu0 0.0
        %425 = vmatpush1.msra.mxu0 0.0
        %426 = vmatprep.subr.mxu0 0.0
        %427 = vmatpush1.msra.mxu0 0.0
        %428 = vmatprep.subr.mxu0 0.0
        %429 = vmatpush1.msra.mxu0 0.0
        %430 = vmatprep.subr.mxu0 0.0
        %431 = vmatpush1.msra.mxu0 0.0
        %432 = vmatprep.subr.mxu0 0.0
        %433 = vmatpush1.msra.mxu0 0.0
        %434 = vmatprep.subr.mxu0 0.0
        %435 = vmatpush1.msra.mxu0 0.0
        %436 = vmatprep.subr.mxu0 0.0
        %437 = vmatpush1.msra.mxu0 0.0
        %438 = vmatprep.subr.mxu0 0.0
        %439 = vmatpush1.msra.mxu0 0.0
        %440 = vmatprep.subr.mxu0 0.0
        %441 = vmatpush1.msra.mxu0 %v408
        %442 = vmatprep.subr.mxu0 0.0
        %443 = vmatpush2.msra.mxu0 0.0
        %444 = vmatprep.subr.mxu0 0.0
        %445 = vmatpush2.msra.mxu0 0.0
        %446 = vmatprep.subr.mxu0 0.0
        %447 = vmatpush2.msra.mxu0 0.0
        %448 = vmatprep.subr.mxu0 0.0
        %449 = vmatpush2.msra.mxu0 0.0
        %450 = vmatprep.subr.mxu0 0.0
        %451 = vmatpush2.msra.mxu0 0.0
        %452 = vmatprep.subr.mxu0 0.0
        %453 = vmatpush2.msra.mxu0 0.0
        %454 = vmatprep.subr.mxu0 0.0
        %455 = vmatpush2.msra.mxu0 0.0
        %456 = vmatprep.subr.mxu0 0.0
        %457 = vmatpush2.msra.mxu0 0.0
        %458 = vmatprep.subr.mxu0 0.0
        %459 = vmatpush2.msra.mxu0 0.0
        %460 = vmatprep.subr.mxu0 0.0
        %461 = vmatpush2.msra.mxu0 0.0
        %462 = vmatprep.subr.mxu0 0.0
        %463 = vmatpush2.msra.mxu0 0.0
        %464 = vmatprep.subr.mxu0 0.0
        %465 = vmatpush2.msra.mxu0 0.0
        %466 = vmatprep.subr.mxu0 0.0
        %467 = vmatpush2.msra.mxu0 0.0
        %468 = vmatprep.subr.mxu0 0.0
        %469 = vmatpush2.msra.mxu0 0.0
        %470 = vmatprep.subr.mxu0 0.0
        %471 = vmatpush2.msra.mxu0 0.0
        %472 = vmatprep.subr.mxu0 0.0
        %473 = vmatpush2.msra.mxu0 0.0
        %474 = vmatprep.mubr.f32.mxu0 0.0
        %475 = vmatmul.mubr.f32.gmra.mxu0 %v406
        %v476 = vpop.f32.mrf.mxu0
        %v477 = vadd.f32 0.0, %v476
        %v478 = vpop.f32.mrf.mxu0
        %479 = vdwg.mxu0
        %v480 = vadd.f32 %v394, %v477
        %vm481 = vcmp.gt.f32.partialorder %v480, 0.0
        %v482 = vmin.f32 %v480, 0.0
        %v483 = vmul.f32 %v482, 1.442695
        %v484 = vpow.pop %v483
        %v485 = vsub.f32 %v484, 1.0
        %v486 = vsel %vm481, %v480, %v485
        %487 = vst [vmem:[%s213] sm:$0xff] %v486
        %s488 = sand.u32 %s118, 1
        %s489 = scalar_lea.sflag [#allocation3], %s488
        %s490 = sand.u32 %s118, 1
        %s491 = smul.addr %s490, 8
        %s492 = scalar_lea.vmem [#allocation2], %s491
        // Predicated region
        $region33: #{basic_conv1d.1} parent=31 // pred_check
          %p493 = pneg %p128
        $region34: #{basic_conv1d.1} parent=31 // pred_check_branch
          %495 = sbr.rel (%p493) target = $region36
        $region35: #{basic_conv1d.1} parent=31 // pred_region
          %s497 = ssub.s32 128, 128
          %498 = vsyncadd %s489, %s497
          %s499 = sadd.s32 %s22, %s21
          %s500 = smul.addr %s499, 128
          %s501 = scalar_lea.hbm %s3, %s500
          %s503 = sshll.u32 %s492, 4
          %s504 = int_to_ptr.vmem [resolvable:$true] %s503
          %506 = dma.vmem_to_hbm [thread:$0]  %s504, 128, %s501, %s489
        $region36: #{basic_conv1d.1} parent=31 // pred_fallthru
          _
      $region32: #{basic_conv1d.1} parent=5 // pred_fallthru
        _
      %p507 = scmp.le.s32.totalorder 2, %s12
      // Predicated region
      $region37: #{basic_conv1d.1} parent=5 // pred_check
        %p508 = pneg %p507
      $region38: #{basic_conv1d.1} parent=5 // pred_check_branch
        %510 = sbr.rel (%p508) target = $region40
      $region39: #{basic_conv1d.1} parent=5 // pred_region
        %s511 = ssub.s32 %s12, 2
        // Predicated region
        $region41: #{basic_conv1d.1} parent=39 // pred_check
          %p512 = pneg %p134
        $region42: #{basic_conv1d.1} parent=39 // pred_check_branch
          %514 = sbr.rel (%p512) target = $region44
        $region43: #{basic_conv1d.1} parent=39 // pred_region
          %s515 = sand.u32 %s119, 1
          %s516 = scalar_lea.sflag [#allocation3], %s515
          %s517 = sand.u32 %s119, 1
          %s518 = smul.addr %s517, 8
          %s519 = scalar_lea.vmem [#allocation2], %s518
          %520 = dma.done %s516, 128
        $region44: #{basic_conv1d.1} parent=39 // pred_fallthru
          _
      $region40: #{basic_conv1d.1} parent=5 // pred_fallthru
        _
    $region6: #{basic_conv1d.1} parent=1 // loop_footer
      %s16 = sadd.s32 1, %s12
    $region7: #{basic_conv1d.1} parent=1 // loop_footer_branch
      %11 = sbr.rel target = $region3
    $region8: #{basic_conv1d.1} parent=1 // loop_exit
      _
    %521 = vsyncpa [#allocation3], 1
    %s522 = scalar_lea.sflag [#allocation3], 1
    %523 = vsyncpa %s522, 1

</llo_original>
